<compile_context>
chip_gen: v7x
topology: tpu7x:2x2x1
jax: 0.10.0
libtpu: 0.0.40
codegen_flags: <defaults>
</compile_context>

<pallas_src>
import jax
import jax.numpy as jnp
import numpy as np
from jax import lax
from jax.experimental import pallas as pl
from jax.experimental.pallas import tpu as pltpu

N, CIN, COUT = 2, 4, 8
D, H, W = 6, 8, 8
KD = KH = KW = 3
PAD = 1
TAPS = KD * KH * KW            # 27 conv taps
K = TAPS * CIN                 # 108 = contraction size
KPAD = 128                     # contraction padded to a full lane width
DHW = D * H * W                # 384
NDHW = N * DHW                 # 768
EPS = 1e-3                     # BatchNorm3d(eps=0.001)
NEG_SLOPE = 0.01               # nn.LeakyReLU() default negative_slope


def _fused_kernel(patches_ref, w_ref, bias_ref, gamma_ref, beta_ref, o_ref):
    # patches_ref: (KPAD, NDHW)   bf16  im2col columns (zero-padded K rows)
    # w_ref      : (COUT, KPAD)   bf16  conv weights   (zero-padded K cols)
    # bias/gamma/beta: (COUT, 1)  f32
    # o_ref      : (N, COUT, DHW) f32   BN + LeakyReLU output

    # Conv3d == a single MXU matmul over the im2col contraction (f32 accumulate).
    y = jnp.dot(w_ref[...], patches_ref[...],
                preferred_element_type=jnp.float32)            # (COUT, NDHW)
    y = y + bias_ref[...]

    # BatchNorm3d training mode: biased batch stats over (n, d, h, w) == the
    # lane axis here.  Two-pass: mean, then centered variance (no cancellation).
    inv_count = 1.0 / float(NDHW)
    mean = jnp.sum(y, axis=1, keepdims=True) * inv_count        # (COUT, 1)
    centered = y - mean
    var = jnp.sum(centered * centered, axis=1, keepdims=True) * inv_count
    scale = gamma_ref[...] * lax.rsqrt(var + EPS)               # (COUT, 1)  (EUP)
    o = centered * scale + beta_ref[...]

    # LeakyReLU.
    o = jnp.where(o >= 0, o, NEG_SLOPE * o)

    # Lane-dense stores: one (COUT, DHW) slab per sample (static slices).
    for n in range(N):
        o_ref[n] = o[:, n * DHW:(n + 1) * DHW]


def basic_conv3d(x_ncdhw, w_torch, bias, gamma, beta):
    """x_ncdhw: (N, CIN, D, H, W); w_torch: (COUT, CIN, KD, KH, KW). Returns NCDHW."""
    # ---- wrapper-side layout plumbing (no compute) -------------------------
    x = jnp.transpose(x_ncdhw, (0, 2, 3, 4, 1))                       # NDHWC
    x_pad = jnp.pad(x, ((0, 0), (PAD, PAD), (PAD, PAD), (PAD, PAD), (0, 0)))

    # im2col: K index = tap*CIN + cin, column = flattened (n, d, h, w).
    cols = []
    for kd in range(KD):
        for kh in range(KH):
            for kw in range(KW):
                cols.append(
                    x_pad[:, kd:kd + D, kh:kh + H, kw:kw + W, :].reshape(NDHW, CIN))
    patches = jnp.concatenate(cols, axis=1)                           # (NDHW, K)
    patches_t = jnp.pad(patches, ((0, 0), (0, KPAD - K))).T           # (KPAD, NDHW)
    patches_t = patches_t.astype(jnp.bfloat16)

    # Weights -> (K, COUT) with the same K ordering, then (COUT, KPAD).
    w = jnp.transpose(w_torch, (2, 3, 4, 1, 0)).reshape(K, COUT)
    w_t = jnp.pad(w, ((0, KPAD - K), (0, 0))).T.astype(jnp.bfloat16)  # (COUT, KPAD)

    out = pl.pallas_call(
        _fused_kernel,
        grid=(1,),
        in_specs=[
            pl.BlockSpec((KPAD, NDHW), lambda i: (0, 0)),
            pl.BlockSpec((COUT, KPAD), lambda i: (0, 0)),
            pl.BlockSpec((COUT, 1), lambda i: (0, 0)),
            pl.BlockSpec((COUT, 1), lambda i: (0, 0)),
            pl.BlockSpec((COUT, 1), lambda i: (0, 0)),
        ],
        out_specs=pl.BlockSpec((N, COUT, DHW), lambda i: (0, 0, 0)),
        out_shape=jax.ShapeDtypeStruct((N, COUT, DHW), jnp.float32),
        compiler_params=pltpu.CompilerParams(dimension_semantics=("arbitrary",)),
    )(patches_t, w_t,
      bias.reshape(COUT, 1), gamma.reshape(COUT, 1), beta.reshape(COUT, 1))

    # TODO(synk): running_mean/running_var buffer updates (momentum) are a
    # stateful side effect of nn.BatchNorm3d and are not modeled (they do not
    # affect the forward output).
    return out.reshape(N, COUT, D, H, W)


if __name__ == "__main__":
    key = jax.random.PRNGKey(0)
    kx, kw, kb = jax.random.split(key, 3)
    x = jax.random.normal(kx, (N, CIN, D, H, W), jnp.float32)
    w = jax.random.normal(kw, (COUT, CIN, KD, KH, KW), jnp.float32) * 0.1
    b = jax.random.normal(kb, (COUT,), jnp.float32) * 0.1
    gamma = jnp.ones((COUT,), jnp.float32)    # BatchNorm3d default affine init
    beta = jnp.zeros((COUT,), jnp.float32)

    out = jax.block_until_ready(basic_conv3d(x, w, b, gamma, beta))
    assert out.shape == (N, COUT, D, H, W)

    # Pure-JAX f32 (HIGHEST precision) reference.
    x_ndhwc = jnp.transpose(x, (0, 2, 3, 4, 1))
    w_dhwio = jnp.transpose(w, (2, 3, 4, 1, 0))
    conv = lax.conv_general_dilated(
        x_ndhwc, w_dhwio, window_strides=(1, 1, 1),
        padding=((PAD, PAD),) * 3,
        dimension_numbers=("NDHWC", "DHWIO", "NDHWC"),
        precision=lax.Precision.HIGHEST) + b
    mean = jnp.mean(conv, axis=(0, 1, 2, 3))
    var = jnp.mean((conv - mean) ** 2, axis=(0, 1, 2, 3))
    bn = (conv - mean) / jnp.sqrt(var + EPS) * gamma + beta
    ref = jnp.where(bn >= 0, bn, NEG_SLOPE * bn)
    ref = jnp.transpose(ref, (0, 4, 1, 2, 3))

    # Kernel uses bf16 MXU operands with f32 accumulation over K=108; expected
    # max abs deviation vs the f32 HIGHEST reference is ~1e-2, so the tolerance
    # is widened accordingly (intentional numerics per perf feedback).
    np.testing.assert_allclose(np.asarray(out), np.asarray(ref),
                               rtol=2e-2, atol=2.5e-2)
    print("KERNEL_OK")
</pallas_src>

<mosaic_0001>
module attributes {stable_mosaic.version = 11 : i64} {
  func.func @_fused_kernel(%arg0: i32, %arg1: memref<128x768xbf16, #tpu.memory_space<vmem>>, %arg2: memref<8x128xbf16, #tpu.memory_space<vmem>>, %arg3: memref<8x1xf32, #tpu.memory_space<vmem>>, %arg4: memref<8x1xf32, #tpu.memory_space<vmem>>, %arg5: memref<8x1xf32, #tpu.memory_space<vmem>>, %arg6: memref<2x8x384xf32, #tpu.memory_space<vmem>>) attributes {dimension_semantics = [#tpu.dimension_semantics<arbitrary>], iteration_bounds = array<i64: 1>, scalar_prefetch = 0 : i64, scratch_operands = 0 : i64, tpu.core_type = #tpu.core_type<tc>, window_params = [{pipeline_mode = #tpu.pipeline_mode<synchronous>, transform_indices = @transform_0, window_bounds = array<i64: 128, 768>}, {pipeline_mode = #tpu.pipeline_mode<synchronous>, transform_indices = @transform_1, window_bounds = array<i64: 8, 128>}, {pipeline_mode = #tpu.pipeline_mode<synchronous>, transform_indices = @transform_2, window_bounds = array<i64: 8, 1>}, {pipeline_mode = #tpu.pipeline_mode<synchronous>, transform_indices = @transform_3, window_bounds = array<i64: 8, 1>}, {pipeline_mode = #tpu.pipeline_mode<synchronous>, transform_indices = @transform_4, window_bounds = array<i64: 8, 1>}, {pipeline_mode = #tpu.pipeline_mode<synchronous>, transform_indices = @transform_5, window_bounds = array<i64: 2, 8, 384>}]} {
    %c0 = arith.constant 0 : index
    %c0_0 = arith.constant 0 : index
    %0 = vector.load %arg2[%c0, %c0_0] : memref<8x128xbf16, #tpu.memory_space<vmem>>, vector<8x128xbf16>
    %c0_1 = arith.constant 0 : index
    %c0_2 = arith.constant 0 : index
    %1 = vector.load %arg1[%c0_1, %c0_2] : memref<128x768xbf16, #tpu.memory_space<vmem>>, vector<128x768xbf16>
    %cst = arith.constant dense<0.000000e+00> : vector<8x768xf32>
    %2 = tpu.matmul %0, %1, %cst {dimension_numbers = #tpu.dot_dimension_numbers<[1], [0], [0], [1], [0, 0, 1, 1], [], []>} : vector<8x128xbf16>, vector<128x768xbf16>, vector<8x768xf32> -> vector<8x768xf32>
    %c0_3 = arith.constant 0 : index
    %c0_4 = arith.constant 0 : index
    %3 = vector.load %arg3[%c0_3, %c0_4] : memref<8x1xf32, #tpu.memory_space<vmem>>, vector<8x1xf32>
    %4 = vector.broadcast %3 : vector<8x1xf32> to vector<8x768xf32>
    %5 = arith.addf %2, %4 : vector<8x768xf32>
    %cst_5 = arith.constant dense<0.000000e+00> : vector<8xf32>
    %6 = vector.multi_reduction <add>, %5, %cst_5 [1] : vector<8x768xf32> to vector<8xf32>
    %7 = vector.shape_cast %6 : vector<8xf32> to vector<8x1xf32>
    %cst_6 = arith.constant 0.00130208337 : f32
    %8 = vector.broadcast %cst_6 : f32 to vector<8x1xf32>
    %9 = arith.mulf %7, %8 : vector<8x1xf32>
    %10 = vector.broadcast %9 : vector<8x1xf32> to vector<8x768xf32>
    %11 = arith.subf %5, %10 : vector<8x768xf32>
    %12 = arith.mulf %11, %11 : vector<8x768xf32>
    %cst_7 = arith.constant dense<0.000000e+00> : vector<8xf32>
    %13 = vector.multi_reduction <add>, %12, %cst_7 [1] : vector<8x768xf32> to vector<8xf32>
    %14 = vector.shape_cast %13 : vector<8xf32> to vector<8x1xf32>
    %cst_8 = arith.constant 0.00130208337 : f32
    %15 = vector.broadcast %cst_8 : f32 to vector<8x1xf32>
    %16 = arith.mulf %14, %15 : vector<8x1xf32>
    %c0_9 = arith.constant 0 : index
    %c0_10 = arith.constant 0 : index
    %17 = vector.load %arg4[%c0_9, %c0_10] : memref<8x1xf32, #tpu.memory_space<vmem>>, vector<8x1xf32>
    %cst_11 = arith.constant 1.000000e-03 : f32
    %18 = vector.broadcast %cst_11 : f32 to vector<8x1xf32>
    %19 = arith.addf %16, %18 : vector<8x1xf32>
    %20 = math.rsqrt %19 : vector<8x1xf32>
    %21 = arith.mulf %17, %20 : vector<8x1xf32>
    %22 = vector.broadcast %21 : vector<8x1xf32> to vector<8x768xf32>
    %23 = arith.mulf %11, %22 : vector<8x768xf32>
    %c0_12 = arith.constant 0 : index
    %c0_13 = arith.constant 0 : index
    %24 = vector.load %arg5[%c0_12, %c0_13] : memref<8x1xf32, #tpu.memory_space<vmem>>, vector<8x1xf32>
    %25 = vector.broadcast %24 : vector<8x1xf32> to vector<8x768xf32>
    %26 = arith.addf %23, %25 : vector<8x768xf32>
    %cst_14 = arith.constant 0.000000e+00 : f32
    %27 = vector.broadcast %cst_14 : f32 to vector<8x768xf32>
    %28 = arith.cmpf oge, %26, %27 : vector<8x768xf32>
    %cst_15 = arith.constant 0.00999999977 : f32
    %29 = vector.broadcast %cst_15 : f32 to vector<8x768xf32>
    %30 = arith.mulf %29, %26 : vector<8x768xf32>
    %31 = arith.select %28, %26, %30 : vector<8x768xi1>, vector<8x768xf32>
    %32 = vector.extract_strided_slice %31 {offsets = [0, 0], sizes = [8, 384], strides = [1, 1]} : vector<8x768xf32> to vector<8x384xf32>
    %c0_16 = arith.constant 0 : index
    %c0_17 = arith.constant 0 : index
    %c0_18 = arith.constant 0 : index
    %33 = vector.load %arg6[%c0_16, %c0_17, %c0_18] : memref<2x8x384xf32, #tpu.memory_space<vmem>>, vector<1x8x384xf32>
    %34 = vector.shape_cast %33 : vector<1x8x384xf32> to vector<8x384xf32>
    %35 = vector.shape_cast %32 : vector<8x384xf32> to vector<1x8x384xf32>
    tpu.vector_store %arg6[%c0_16, %c0_17, %c0_18], %35 {strides = array<i32>} : memref<2x8x384xf32, #tpu.memory_space<vmem>>, vector<1x8x384xf32>,
    %36 = vector.extract_strided_slice %31 {offsets = [0, 384], sizes = [8, 384], strides = [1, 1]} : vector<8x768xf32> to vector<8x384xf32>
    %c1 = arith.constant 1 : index
    %c0_19 = arith.constant 0 : index
    %c0_20 = arith.constant 0 : index
    %37 = vector.load %arg6[%c1, %c0_19, %c0_20] : memref<2x8x384xf32, #tpu.memory_space<vmem>>, vector<1x8x384xf32>
    %38 = vector.shape_cast %37 : vector<1x8x384xf32> to vector<8x384xf32>
    %39 = vector.shape_cast %36 : vector<8x384xf32> to vector<1x8x384xf32>
    tpu.vector_store %arg6[%c1, %c0_19, %c0_20], %39 {strides = array<i32>} : memref<2x8x384xf32, #tpu.memory_space<vmem>>, vector<1x8x384xf32>,
    return
  }
  func.func @transform_0(%arg0: i32) -> (i32, i32) {
    %c0_i32 = arith.constant 0 : i32
    %c0_i32_0 = arith.constant 0 : i32
    %c0_i32_1 = arith.constant 0 : i32
    return %c0_i32, %c0_i32_0 : i32, i32
  }
  func.func @transform_1(%arg0: i32) -> (i32, i32) {
    %c0_i32 = arith.constant 0 : i32
    %c0_i32_0 = arith.constant 0 : i32
    %c0_i32_1 = arith.constant 0 : i32
    return %c0_i32, %c0_i32_0 : i32, i32
  }
  func.func @transform_2(%arg0: i32) -> (i32, i32) {
    %c0_i32 = arith.constant 0 : i32
    %c0_i32_0 = arith.constant 0 : i32
    %c0_i32_1 = arith.constant 0 : i32
    return %c0_i32, %c0_i32_0 : i32, i32
  }
  func.func @transform_3(%arg0: i32) -> (i32, i32) {
    %c0_i32 = arith.constant 0 : i32
    %c0_i32_0 = arith.constant 0 : i32
    %c0_i32_1 = arith.constant 0 : i32
    return %c0_i32, %c0_i32_0 : i32, i32
  }
  func.func @transform_4(%arg0: i32) -> (i32, i32) {
    %c0_i32 = arith.constant 0 : i32
    %c0_i32_0 = arith.constant 0 : i32
    %c0_i32_1 = arith.constant 0 : i32
    return %c0_i32, %c0_i32_0 : i32, i32
  }
  func.func @transform_5(%arg0: i32) -> (i32, i32, i32) {
    %c0_i32 = arith.constant 0 : i32
    %c0_i32_0 = arith.constant 0 : i32
    %c0_i32_1 = arith.constant 0 : i32
    %c0_i32_2 = arith.constant 0 : i32
    return %c0_i32, %c0_i32_0, %c0_i32_1 : i32, i32, i32
  }
}

</mosaic_0001>

<llo_original>
// kernel: tpu_custom_call.1
$region0: #{tpu_custom_call.1}
  #allocation0 [shape = 'u32[]', space=smem, size = 0x4, offset = 0x4, fixed_abs, tag = 'smem constant byte address 0x4 - core index']
  #allocation1 [shape = 'u32[144,128]{1,0:T(1,128)}', space=vmem, size = 0x12000, scoped, tag = 'internal scratch']
  %s0 = inlined_call_operand.hbm [shape: bf16[128,768], index: 0, kind: input, shape index: {}]
  %s1 = inlined_call_operand.vmem [shape: bf16[8,128], index: 1, kind: input, shape index: {}]
  %s2 = inlined_call_operand.vmem [shape: f32[8,1], index: 2, kind: input, shape index: {}]
  %s3 = inlined_call_operand.vmem [shape: f32[8,1], index: 3, kind: input, shape index: {}]
  %s4 = inlined_call_operand.vmem [shape: f32[8,1], index: 4, kind: input, shape index: {}]
  %s5 = inlined_call_operand.hbm [shape: f32[2,8,384], index: 5, kind: output, shape index: {}]
  %s6 = sld [smem:[#allocation0]]
  $region34: #{tpu_custom_call.1} parent=0
    _
  %s8 = ssub.s32 1, %s6
  %s9 = scalar_select 0, %s8, %s6
  $region1: #{tpu_custom_call.1} parent=0
    #allocation2 [shape = 'u8[196608]{0}', space=vmem, size = 0x30000, scoped, tag = 'input window, operand 0, single buffered']
    #allocation3 [shape = 's32[1]{0}', space=sflag, size = 0x4, scoped, tag = 'scoped memory for tpu_custom_call.1']
    #allocation4 [shape = 's32[1]{0}', space=sflag, size = 0x4, scoped, tag = 'scoped memory for tpu_custom_call.1']
    #allocation5 [shape = 'u8[24576]{0}', space=vmem, size = 0x6000, scoped, tag = 'output window, operand 0, single buffered']
    %10 = vsyncpa [#allocation3], 0
    %11 = vsyncpa [#allocation4], 0
    // Predicated region
    $region2: #{tpu_custom_call.1} parent=1 // pred_check
      _
    $region3: #{tpu_custom_call.1} parent=1 // pred_check_branch
      %13 = sbr.rel (0) target = $region5
    $region4: #{tpu_custom_call.1} parent=1 // pred_region
      %s15 = ssub.s32 6144, 6144
      %16 = vsyncadd [#allocation3], %s15
      %s17 = sshll.u32 [#allocation2], 4
      %s18 = int_to_ptr.vmem [resolvable:$true] %s17
      %23 = dma.hbm_to_vmem [thread:$0]  %s0, 6144, %s18, [#allocation3], 384, 384, 24
    $region5: #{tpu_custom_call.1} parent=1 // pred_fallthru
      _
    // Predicated region
    $region6: #{tpu_custom_call.1} parent=1 // pred_check
      _
    $region7: #{tpu_custom_call.1} parent=1 // pred_check_branch
      %25 = sbr.rel (0) target = $region9
    $region8: #{tpu_custom_call.1} parent=1 // pred_region
      _
    $region9: #{tpu_custom_call.1} parent=1 // pred_fallthru
      _
    // Predicated region
    $region10: #{tpu_custom_call.1} parent=1 // pred_check
      _
    $region11: #{tpu_custom_call.1} parent=1 // pred_check_branch
      %27 = sbr.rel (0) target = $region13
    $region12: #{tpu_custom_call.1} parent=1 // pred_region
      _
    $region13: #{tpu_custom_call.1} parent=1 // pred_fallthru
      _
    // Predicated region
    $region14: #{tpu_custom_call.1} parent=1 // pred_check
      _
    $region15: #{tpu_custom_call.1} parent=1 // pred_check_branch
      %29 = sbr.rel (0) target = $region17
    $region16: #{tpu_custom_call.1} parent=1 // pred_region
      _
    $region17: #{tpu_custom_call.1} parent=1 // pred_fallthru
      _
    // Predicated region
    $region18: #{tpu_custom_call.1} parent=1 // pred_check
      _
    $region19: #{tpu_custom_call.1} parent=1 // pred_check_branch
      %31 = sbr.rel (0) target = $region21
    $region20: #{tpu_custom_call.1} parent=1 // pred_region
      _
    $region21: #{tpu_custom_call.1} parent=1 // pred_fallthru
      _
    // Predicated region
    $region22: #{tpu_custom_call.1} parent=1 // pred_check
      _
    $region23: #{tpu_custom_call.1} parent=1 // pred_check_branch
      %33 = sbr.rel (0) target = $region25
    $region24: #{tpu_custom_call.1} parent=1 // pred_region
      %34 = dma.done [#allocation3], 6144
    $region25: #{tpu_custom_call.1} parent=1 // pred_fallthru
      _
    %v36 = vld [vmem:[%s1] sm:$0xf]
    %v37 = vld [vmem:[#allocation2] sm:$0xff]
    %v38 = vld [vmem:[#allocation2 + $0x8] sm:$0xff]
    %v39 = vld [vmem:[#allocation2 + $0x10] sm:$0xff]
    %v40 = vld [vmem:[#allocation2 + $0x18] sm:$0xff]
    %v41 = vld [vmem:[#allocation2 + $0x20] sm:$0xff]
    %v42 = vld [vmem:[#allocation2 + $0x28] sm:$0xff]
    %v43 = vld [vmem:[#allocation2 + $0x30] sm:$0xff]
    %v44 = vld [vmem:[#allocation2 + $0x38] sm:$0xff]
    %v45 = vld [vmem:[#allocation2 + $0x40] sm:$0xff]
    %v46 = vld [vmem:[#allocation2 + $0x48] sm:$0xff]
    %v47 = vld [vmem:[#allocation2 + $0x50] sm:$0xff]
    %v48 = vld [vmem:[#allocation2 + $0x58] sm:$0xff]
    %v49 = vld [vmem:[#allocation2 + $0x60] sm:$0xff]
    %v50 = vld [vmem:[#allocation2 + $0x68] sm:$0xff]
    %v51 = vld [vmem:[#allocation2 + $0x70] sm:$0xff]
    %v52 = vld [vmem:[#allocation2 + $0x78] sm:$0xff]
    %v53 = vld [vmem:[#allocation2 + $0x80] sm:$0xff]
    %v54 = vld [vmem:[#allocation2 + $0x88] sm:$0xff]
    %v55 = vld [vmem:[#allocation2 + $0x90] sm:$0xff]
    %v56 = vld [vmem:[#allocation2 + $0x98] sm:$0xff]
    %v57 = vld [vmem:[#allocation2 + $0xa0] sm:$0xff]
    %v58 = vld [vmem:[#allocation2 + $0xa8] sm:$0xff]
    %v59 = vld [vmem:[#allocation2 + $0xb0] sm:$0xff]
    %v60 = vld [vmem:[#allocation2 + $0xb8] sm:$0xff]
    %v61 = vld [vmem:[#allocation2 + $0xc0] sm:$0xff]
    %v62 = vld [vmem:[#allocation2 + $0xc8] sm:$0xff]
    %v63 = vld [vmem:[#allocation2 + $0xd0] sm:$0xff]
    %v64 = vld [vmem:[#allocation2 + $0xd8] sm:$0xff]
    %v65 = vld [vmem:[#allocation2 + $0xe0] sm:$0xff]
    %v66 = vld [vmem:[#allocation2 + $0xe8] sm:$0xff]
    %v67 = vld [vmem:[#allocation2 + $0xf0] sm:$0xff]
    %v68 = vld [vmem:[#allocation2 + $0xf8] sm:$0xff]
    %v69 = vld [vmem:[#allocation2 + $0x100] sm:$0xff]
    %v70 = vld [vmem:[#allocation2 + $0x108] sm:$0xff]
    %v71 = vld [vmem:[#allocation2 + $0x110] sm:$0xff]
    %v72 = vld [vmem:[#allocation2 + $0x118] sm:$0xff]
    %v73 = vld [vmem:[#allocation2 + $0x120] sm:$0xff]
    %v74 = vld [vmem:[#allocation2 + $0x128] sm:$0xff]
    %v75 = vld [vmem:[#allocation2 + $0x130] sm:$0xff]
    %v76 = vld [vmem:[#allocation2 + $0x138] sm:$0xff]
    %v77 = vld [vmem:[#allocation2 + $0x140] sm:$0xff]
    %v78 = vld [vmem:[#allocation2 + $0x148] sm:$0xff]
    %v79 = vld [vmem:[#allocation2 + $0x150] sm:$0xff]
    %v80 = vld [vmem:[#allocation2 + $0x158] sm:$0xff]
    %v81 = vld [vmem:[#allocation2 + $0x160] sm:$0xff]
    %v82 = vld [vmem:[#allocation2 + $0x168] sm:$0xff]
    %v83 = vld [vmem:[#allocation2 + $0x170] sm:$0xff]
    %v84 = vld [vmem:[#allocation2 + $0x178] sm:$0xff]
    %v85 = vld [vmem:[%s2] sm:$0xff]
    %87 = vset.pattern.permute.xlu0 0
    %88 = vperm.xlu0 %87, %v85
    %v89 = vpop.permute.xlu0 %88
    %v139 = vunpack.c.l.b16 %v37
    %v140 = vunpack.c.h.b16 %v37
    %v141 = vunpack.c.l.b16 %v38
    %v142 = vunpack.c.h.b16 %v38
    %v143 = vunpack.c.l.b16 %v39
    %v144 = vunpack.c.h.b16 %v39
    %v145 = vunpack.c.l.b16 %v40
    %v146 = vunpack.c.h.b16 %v40
    %v147 = vunpack.c.l.b16 %v41
    %v148 = vunpack.c.h.b16 %v41
    %v149 = vunpack.c.l.b16 %v42
    %v150 = vunpack.c.h.b16 %v42
    %v151 = vunpack.c.l.b16 %v43
    %v152 = vunpack.c.h.b16 %v43
    %v153 = vunpack.c.l.b16 %v44
    %v154 = vunpack.c.h.b16 %v44
    %v155 = vunpack.c.l.b16 %v45
    %v156 = vunpack.c.h.b16 %v45
    %v157 = vunpack.c.l.b16 %v46
    %v158 = vunpack.c.h.b16 %v46
    %v159 = vunpack.c.l.b16 %v47
    %v160 = vunpack.c.h.b16 %v47
    %v161 = vunpack.c.l.b16 %v48
    %v162 = vunpack.c.h.b16 %v48
    %v163 = vunpack.c.l.b16 %v49
    %v164 = vunpack.c.h.b16 %v49
    %v165 = vunpack.c.l.b16 %v50
    %v166 = vunpack.c.h.b16 %v50
    %v167 = vunpack.c.l.b16 %v51
    %v168 = vunpack.c.h.b16 %v51
    %v169 = vunpack.c.l.b16 %v52
    %v170 = vunpack.c.h.b16 %v52
    %v171 = vunpack.c.l.b16 %v53
    %v172 = vunpack.c.h.b16 %v53
    %v173 = vunpack.c.l.b16 %v54
    %v174 = vunpack.c.h.b16 %v54
    %v175 = vunpack.c.l.b16 %v55
    %v176 = vunpack.c.h.b16 %v55
    %v177 = vunpack.c.l.b16 %v56
    %v178 = vunpack.c.h.b16 %v56
    %v179 = vunpack.c.l.b16 %v57
    %v180 = vunpack.c.h.b16 %v57
    %v181 = vunpack.c.l.b16 %v58
    %v182 = vunpack.c.h.b16 %v58
    %v183 = vunpack.c.l.b16 %v59
    %v184 = vunpack.c.h.b16 %v59
    %v185 = vunpack.c.l.b16 %v60
    %v186 = vunpack.c.h.b16 %v60
    %v187 = vunpack.c.l.b16 %v61
    %v188 = vunpack.c.h.b16 %v61
    %v189 = vunpack.c.l.b16 %v62
    %v190 = vunpack.c.h.b16 %v62
    %v191 = vunpack.c.l.b16 %v63
    %v192 = vunpack.c.h.b16 %v63
    %v193 = vunpack.c.l.b16 %v64
    %v194 = vunpack.c.h.b16 %v64
    %v195 = vunpack.c.l.b16 %v65
    %v196 = vunpack.c.h.b16 %v65
    %v197 = vunpack.c.l.b16 %v66
    %v198 = vunpack.c.h.b16 %v66
    %v199 = vunpack.c.l.b16 %v67
    %v200 = vunpack.c.h.b16 %v67
    %v201 = vunpack.c.l.b16 %v68
    %v202 = vunpack.c.h.b16 %v68
    %v203 = vunpack.c.l.b16 %v69
    %v204 = vunpack.c.h.b16 %v69
    %v205 = vunpack.c.l.b16 %v70
    %v206 = vunpack.c.h.b16 %v70
    %v207 = vunpack.c.l.b16 %v71
    %v208 = vunpack.c.h.b16 %v71
    %v209 = vunpack.c.l.b16 %v72
    %v210 = vunpack.c.h.b16 %v72
    %v211 = vunpack.c.l.b16 %v73
    %v212 = vunpack.c.h.b16 %v73
    %v213 = vunpack.c.l.b16 %v74
    %v214 = vunpack.c.h.b16 %v74
    %v215 = vunpack.c.l.b16 %v75
    %v216 = vunpack.c.h.b16 %v75
    %v217 = vunpack.c.l.b16 %v76
    %v218 = vunpack.c.h.b16 %v76
    %v219 = vunpack.c.l.b16 %v77
    %v220 = vunpack.c.h.b16 %v77
    %v221 = vunpack.c.l.b16 %v78
    %v222 = vunpack.c.h.b16 %v78
    %v223 = vunpack.c.l.b16 %v79
    %v224 = vunpack.c.h.b16 %v79
    %v225 = vunpack.c.l.b16 %v80
    %v226 = vunpack.c.h.b16 %v80
    %v227 = vunpack.c.l.b16 %v81
    %v228 = vunpack.c.h.b16 %v81
    %v229 = vunpack.c.l.b16 %v82
    %v230 = vunpack.c.h.b16 %v82
    %v231 = vunpack.c.l.b16 %v83
    %v232 = vunpack.c.h.b16 %v83
    %v233 = vunpack.c.l.b16 %v84
    %v234 = vunpack.c.h.b16 %v84
    %v235 = vpack.c.b16 %v145, %v139
    %v236 = vpack.c.b16 %v146, %v140
    %v237 = vpack.c.b16 %v147, %v141
    %v238 = vpack.c.b16 %v148, %v142
    %v239 = vpack.c.b16 %v149, %v143
    %v240 = vpack.c.b16 %v150, %v144
    %v241 = vpack.c.b16 %v157, %v151
    %v242 = vpack.c.b16 %v158, %v152
    %v243 = vpack.c.b16 %v159, %v153
    %v244 = vpack.c.b16 %v160, %v154
    %v245 = vpack.c.b16 %v161, %v155
    %v246 = vpack.c.b16 %v162, %v156
    %v247 = vpack.c.b16 %v169, %v163
    %v248 = vpack.c.b16 %v170, %v164
    %v249 = vpack.c.b16 %v171, %v165
    %v250 = vpack.c.b16 %v172, %v166
    %v251 = vpack.c.b16 %v173, %v167
    %v252 = vpack.c.b16 %v174, %v168
    %v253 = vpack.c.b16 %v181, %v175
    %v254 = vpack.c.b16 %v182, %v176
    %v255 = vpack.c.b16 %v183, %v177
    %v256 = vpack.c.b16 %v184, %v178
    %v257 = vpack.c.b16 %v185, %v179
    %v258 = vpack.c.b16 %v186, %v180
    %v259 = vpack.c.b16 %v193, %v187
    %v260 = vpack.c.b16 %v194, %v188
    %v261 = vpack.c.b16 %v195, %v189
    %v262 = vpack.c.b16 %v196, %v190
    %v263 = vpack.c.b16 %v197, %v191
    %v264 = vpack.c.b16 %v198, %v192
    %v265 = vpack.c.b16 %v205, %v199
    %v266 = vpack.c.b16 %v206, %v200
    %v267 = vpack.c.b16 %v207, %v201
    %v268 = vpack.c.b16 %v208, %v202
    %v269 = vpack.c.b16 %v209, %v203
    %v270 = vpack.c.b16 %v210, %v204
    %v271 = vpack.c.b16 %v217, %v211
    %v272 = vpack.c.b16 %v218, %v212
    %v273 = vpack.c.b16 %v219, %v213
    %v274 = vpack.c.b16 %v220, %v214
    %v275 = vpack.c.b16 %v221, %v215
    %v276 = vpack.c.b16 %v222, %v216
    %v277 = vpack.c.b16 %v229, %v223
    %v278 = vpack.c.b16 %v230, %v224
    %v279 = vpack.c.b16 %v231, %v225
    %v280 = vpack.c.b16 %v232, %v226
    %v281 = vpack.c.b16 %v233, %v227
    %v282 = vpack.c.b16 %v234, %v228
    %331 = vmatprep.subr.bf16.mxu0 %v236
    %332 = vmatpush1.bf16.msra.mxu0 %v235
    %333 = vmatprep.subr.bf16.mxu0 %v242
    %334 = vmatpush1.bf16.msra.mxu0 %v241
    %335 = vmatprep.subr.bf16.mxu0 %v248
    %336 = vmatpush1.bf16.msra.mxu0 %v247
    %337 = vmatprep.subr.bf16.mxu0 %v254
    %338 = vmatpush1.bf16.msra.mxu0 %v253
    %339 = vmatprep.subr.bf16.mxu0 %v260
    %340 = vmatpush1.bf16.msra.mxu0 %v259
    %341 = vmatprep.subr.bf16.mxu0 %v266
    %342 = vmatpush1.bf16.msra.mxu0 %v265
    %343 = vmatprep.subr.bf16.mxu0 %v272
    %344 = vmatpush1.bf16.msra.mxu0 %v271
    %345 = vmatprep.subr.bf16.mxu0 %v278
    %346 = vmatpush1.bf16.msra.mxu0 %v277
    %347 = vmatprep.subr.bf16.mxu0 0
    %348 = vmatpush1.bf16.msra.mxu0 0
    %349 = vmatprep.subr.bf16.mxu0 0
    %350 = vmatpush1.bf16.msra.mxu0 0
    %351 = vmatprep.subr.bf16.mxu0 0
    %352 = vmatpush1.bf16.msra.mxu0 0
    %353 = vmatprep.subr.bf16.mxu0 0
    %354 = vmatpush1.bf16.msra.mxu0 0
    %355 = vmatprep.subr.bf16.mxu0 0
    %356 = vmatpush1.bf16.msra.mxu0 0
    %357 = vmatprep.subr.bf16.mxu0 0
    %358 = vmatpush1.bf16.msra.mxu0 0
    %359 = vmatprep.subr.bf16.mxu0 0
    %360 = vmatpush1.bf16.msra.mxu0 0
    %361 = vmatprep.subr.bf16.mxu0 0
    %362 = vmatpush1.bf16.msra.mxu0 0
    %363 = vmatprep.mubr.bf16.mxu0 0
    %364 = vmatmul.mubr.bf16.gmra.mrb[0].mxu0 %v36
    %v365 = vpop.f32.mrb[0].mxu0
    %v366 = vadd.f32 %v89, %v365
    %v367 = vpop.f32.mrb[0].mxu0
    %v368 = vadd.f32 %v89, %v367
    %v369 = vpop.f32.mrb[0].mxu0
    %v370 = vpop.f32.mrb[0].mxu0
    %371 = vdwg.mxu0
    %372 = vmatprep.subr.bf16.mxu0 %v238
    %373 = vmatpush1.bf16.msra.mxu0 %v237
    %374 = vmatprep.subr.bf16.mxu0 %v244
    %375 = vmatpush1.bf16.msra.mxu0 %v243
    %376 = vmatprep.subr.bf16.mxu0 %v250
    %377 = vmatpush1.bf16.msra.mxu0 %v249
    %378 = vmatprep.subr.bf16.mxu0 %v256
    %379 = vmatpush1.bf16.msra.mxu0 %v255
    %380 = vmatprep.subr.bf16.mxu0 %v262
    %381 = vmatpush1.bf16.msra.mxu0 %v261
    %382 = vmatprep.subr.bf16.mxu0 %v268
    %383 = vmatpush1.bf16.msra.mxu0 %v267
    %384 = vmatprep.subr.bf16.mxu0 %v274
    %385 = vmatpush1.bf16.msra.mxu0 %v273
    %386 = vmatprep.subr.bf16.mxu0 %v280
    %387 = vmatpush1.bf16.msra.mxu0 %v279
    %388 = vmatprep.subr.bf16.mxu0 0
    %389 = vmatpush1.bf16.msra.mxu0 0
    %390 = vmatprep.subr.bf16.mxu0 0
    %391 = vmatpush1.bf16.msra.mxu0 0
    %392 = vmatprep.subr.bf16.mxu0 0
    %393 = vmatpush1.bf16.msra.mxu0 0
    %394 = vmatprep.subr.bf16.mxu0 0
    %395 = vmatpush1.bf16.msra.mxu0 0
    %396 = vmatprep.subr.bf16.mxu0 0
    %397 = vmatpush1.bf16.msra.mxu0 0
    %398 = vmatprep.subr.bf16.mxu0 0
    %399 = vmatpush1.bf16.msra.mxu0 0
    %400 = vmatprep.subr.bf16.mxu0 0
    %401 = vmatpush1.bf16.msra.mxu0 0
    %402 = vmatprep.subr.bf16.mxu0 0
    %403 = vmatpush1.bf16.msra.mxu0 0
    %404 = vmatprep.mubr.bf16.mxu0 0
    %405 = vmatmul.mubr.bf16.gmra.mrb[0].mxu0 %v36
    %v406 = vpop.f32.mrb[0].mxu0
    %v407 = vadd.f32 %v89, %v406
    %v408 = vpop.f32.mrb[0].mxu0
    %v409 = vadd.f32 %v89, %v408
    %v410 = vpop.f32.mrb[0].mxu0
    %v411 = vpop.f32.mrb[0].mxu0
    %412 = vdwg.mxu0
    %413 = vmatprep.subr.bf16.mxu0 %v240
    %414 = vmatpush1.bf16.msra.mxu0 %v239
    %415 = vmatprep.subr.bf16.mxu0 %v246
    %416 = vmatpush1.bf16.msra.mxu0 %v245
    %417 = vmatprep.subr.bf16.mxu0 %v252
    %418 = vmatpush1.bf16.msra.mxu0 %v251
    %419 = vmatprep.subr.bf16.mxu0 %v258
    %420 = vmatpush1.bf16.msra.mxu0 %v257
    %421 = vmatprep.subr.bf16.mxu0 %v264
    %422 = vmatpush1.bf16.msra.mxu0 %v263
    %423 = vmatprep.subr.bf16.mxu0 %v270
    %424 = vmatpush1.bf16.msra.mxu0 %v269
    %425 = vmatprep.subr.bf16.mxu0 %v276
    %426 = vmatpush1.bf16.msra.mxu0 %v275
    %427 = vmatprep.subr.bf16.mxu0 %v282
    %428 = vmatpush1.bf16.msra.mxu0 %v281
    %429 = vmatprep.subr.bf16.mxu0 0
    %430 = vmatpush1.bf16.msra.mxu0 0
    %431 = vmatprep.subr.bf16.mxu0 0
    %432 = vmatpush1.bf16.msra.mxu0 0
    %433 = vmatprep.subr.bf16.mxu0 0
    %434 = vmatpush1.bf16.msra.mxu0 0
    %435 = vmatprep.subr.bf16.mxu0 0
    %436 = vmatpush1.bf16.msra.mxu0 0
    %437 = vmatprep.subr.bf16.mxu0 0
    %438 = vmatpush1.bf16.msra.mxu0 0
    %439 = vmatprep.subr.bf16.mxu0 0
    %440 = vmatpush1.bf16.msra.mxu0 0
    %441 = vmatprep.subr.bf16.mxu0 0
    %442 = vmatpush1.bf16.msra.mxu0 0
    %443 = vmatprep.subr.bf16.mxu0 0
    %444 = vmatpush1.bf16.msra.mxu0 0
    %445 = vmatprep.mubr.bf16.mxu0 0
    %446 = vmatmul.mubr.bf16.gmra.mrb[0].mxu0 %v36
    %v447 = vpop.f32.mrb[0].mxu0
    %v448 = vadd.f32 %v89, %v447
    %v449 = vpop.f32.mrb[0].mxu0
    %v450 = vadd.f32 %v89, %v449
    %v451 = vpop.f32.mrb[0].mxu0
    %v452 = vpop.f32.mrb[0].mxu0
    %453 = vdwg.mxu0
    %v454 = vadd.f32 %v366, %v368
    %v455 = vadd.f32 %v454, %v407
    %v456 = vadd.f32 %v455, %v409
    %v457 = vadd.f32 %v456, %v448
    %v458 = vadd.f32 %v457, %v450
    %459 = vadd.xlane.f32.xlu0 %v458
    %v460 = vpop.xlane.xlu0 %459
    %v461 = vmul.f32 %v460, 0.0013020834
    %v462 = vsub.f32 %v366, %v461
    %v463 = vsub.f32 %v368, %v461
    %v464 = vsub.f32 %v407, %v461
    %v465 = vsub.f32 %v409, %v461
    %v466 = vsub.f32 %v448, %v461
    %v467 = vsub.f32 %v450, %v461
    %v468 = vmul.f32 %v462, %v462
    %v469 = vmul.f32 %v463, %v463
    %v470 = vmul.f32 %v464, %v464
    %v471 = vmul.f32 %v465, %v465
    %v472 = vmul.f32 %v466, %v466
    %v473 = vmul.f32 %v467, %v467
    %v474 = vadd.f32 %v468, %v469
    %v475 = vadd.f32 %v474, %v470
    %v476 = vadd.f32 %v475, %v471
    %v477 = vadd.f32 %v476, %v472
    %v478 = vadd.f32 %v477, %v473
    %479 = vadd.xlane.f32.xlu0 %v478
    %v480 = vpop.xlane.xlu0 %479
    %v481 = vmul.f32 %v480, 0.0013020834
    %v482 = vld [vmem:[%s3] sm:$0xff]
    %v483 = vadd.f32 %v481, 0.001
    %v484 = vrsqrt.pop %v483
    %v485 = vmul.f32 %v482, %v484
    %487 = vset.pattern.permute.xlu0 0
    %488 = vperm.xlu0 %487, %v485
    %v489 = vpop.permute.xlu0 %488
    %v491 = vmul.f32 %v462, %v489
    %v492 = vmul.f32 %v463, %v489
    %v493 = vmul.f32 %v464, %v489
    %v494 = vmul.f32 %v465, %v489
    %v495 = vmul.f32 %v466, %v489
    %v496 = vmul.f32 %v467, %v489
    %v497 = vld [vmem:[%s4] sm:$0xff]
    %499 = vset.pattern.permute.xlu0 0
    %500 = vperm.xlu0 %499, %v497
    %v501 = vpop.permute.xlu0 %500
    %v503 = vadd.f32 %v491, %v501
    %v504 = vadd.f32 %v492, %v501
    %v505 = vadd.f32 %v493, %v501
    %v506 = vadd.f32 %v494, %v501
    %v507 = vadd.f32 %v495, %v501
    %v508 = vadd.f32 %v496, %v501
    %vm509 = vcmp.ge.f32.partialorder %v503, 0.0
    %vm510 = vcmp.ge.f32.partialorder %v504, 0.0
    %vm511 = vcmp.ge.f32.partialorder %v505, 0.0
    %vm512 = vcmp.ge.f32.partialorder %v506, 0.0
    %vm513 = vcmp.ge.f32.partialorder %v507, 0.0
    %vm514 = vcmp.ge.f32.partialorder %v508, 0.0
    %v515 = vmul.f32 %v503, 0.01
    %v516 = vmul.f32 %v504, 0.01
    %v517 = vmul.f32 %v505, 0.01
    %v518 = vmul.f32 %v506, 0.01
    %v519 = vmul.f32 %v507, 0.01
    %v520 = vmul.f32 %v508, 0.01
    %v521 = vsel %vm509, %v503, %v515
    %v522 = vsel %vm510, %v504, %v516
    %v523 = vsel %vm511, %v505, %v517
    %v524 = vsel %vm512, %v506, %v518
    %v525 = vsel %vm513, %v507, %v519
    %v526 = vsel %vm514, %v508, %v520
    %527 = vst [vmem:[#allocation5] sm:$0xff] %v521
    %528 = vst [vmem:[#allocation5 + $0x8] sm:$0xff] %v522
    %529 = vst [vmem:[#allocation5 + $0x10] sm:$0xff] %v523
    %s530 = scalar_lea.vmem [#allocation5], 24
    %531 = vst [vmem:[%s530] sm:$0xff] %v524
    %532 = vst [vmem:[%s530 + $0x8] sm:$0xff] %v525
    %533 = vst [vmem:[%s530 + $0x10] sm:$0xff] %v526
    // Predicated region
    $region26: #{tpu_custom_call.1} parent=1 // pred_check
      _
    $region27: #{tpu_custom_call.1} parent=1 // pred_check_branch
      %535 = sbr.rel (0) target = $region29
    $region28: #{tpu_custom_call.1} parent=1 // pred_region
      %s537 = ssub.s32 768, 768
      %538 = vsyncadd [#allocation4], %s537
      %s539 = sshll.u32 [#allocation5], 4
      %s540 = int_to_ptr.vmem [resolvable:$true] %s539
      %545 = dma.vmem_to_hbm [thread:$0]  %s540, 768, %s5, [#allocation4], 384, 384, 24
    $region29: #{tpu_custom_call.1} parent=1 // pred_fallthru
      _
    // Predicated region
    $region30: #{tpu_custom_call.1} parent=1 // pred_check
      _
    $region31: #{tpu_custom_call.1} parent=1 // pred_check_branch
      %547 = sbr.rel (0) target = $region33
    $region32: #{tpu_custom_call.1} parent=1 // pred_region
      %548 = dma.done [#allocation4], 768
    $region33: #{tpu_custom_call.1} parent=1 // pred_fallthru
      _
    %549 = vsyncpa [#allocation3], 1
    %550 = vsyncpa [#allocation4], 1

</llo_original>
